<compile_context>
chip_gen: v6e
topology: v6e:2x2x1
jax: 0.10.0
libtpu: 0.0.40
codegen_flags: <defaults>
</compile_context>

<pallas_src>
import jax
import jax.numpy as jnp
from jax.experimental import pallas as pl
from jax.experimental.pallas import tpu as pltpu

LANE = 128
VMEM_LIMIT = 48 * 1024 * 1024


def _round_up(x, m):
    return ((x + m - 1) // m) * m


# ---------------------------------------------------------------------------
# Pallas kernels
# ---------------------------------------------------------------------------

def _make_matmul_kernel(apply_relu, has_residual):
    """out = relu?((x @ w) * scale + bias (+ residual)); f32 accumulate over K."""
    def kernel(*refs):
        if has_residual:
            x_ref, w_ref, s_ref, b_ref, r_ref, o_ref, acc_ref = refs
        else:
            x_ref, w_ref, s_ref, b_ref, o_ref, acc_ref = refs
            r_ref = None

        @pl.when(pl.program_id(2) == 0)
        def _():
            acc_ref[...] = jnp.zeros_like(acc_ref)

        acc_ref[...] += jnp.dot(x_ref[...], w_ref[...],
                                preferred_element_type=jnp.float32)

        @pl.when(pl.program_id(2) == pl.num_programs(2) - 1)
        def _():
            out = acc_ref[...] * s_ref[...] + b_ref[...]
            if has_residual:
                out = out + r_ref[...].astype(jnp.float32)
            if apply_relu:
                out = jnp.maximum(out, 0.0)
            o_ref[...] = out.astype(o_ref.dtype)

    return kernel


def matmul_bn(x, w, scale, bias, residual=None, relu=False):
    """Fused bf16 matmul + BN scale/bias (+ residual) (+ ReLU), f32 accumulator."""
    M, K = x.shape
    K2, N = w.shape
    assert K == K2 and K % LANE == 0 and N % LANE == 0
    tm = min(512, _round_up(M, 8))
    tn = 256 if N % 256 == 0 else 128
    tk = 512 if K % 512 == 0 else (256 if K % 256 == 0 else 128)
    grid = (pl.cdiv(M, tm), N // tn, K // tk)

    s2 = scale.reshape(1, N).astype(jnp.float32)
    b2 = bias.reshape(1, N).astype(jnp.float32)

    in_specs = [
        pl.BlockSpec((tm, tk), lambda i, j, k: (i, k)),
        pl.BlockSpec((tk, tn), lambda i, j, k: (k, j)),
        pl.BlockSpec((1, tn), lambda i, j, k: (0, j)),
        pl.BlockSpec((1, tn), lambda i, j, k: (0, j)),
    ]
    args = [x.astype(jnp.bfloat16), w, s2, b2]
    if residual is not None:
        in_specs.append(pl.BlockSpec((tm, tn), lambda i, j, k: (i, j)))
        args.append(residual.astype(jnp.bfloat16))

    return pl.pallas_call(
        _make_matmul_kernel(relu, residual is not None),
        out_shape=jax.ShapeDtypeStruct((M, N), jnp.bfloat16),
        grid=grid,
        in_specs=in_specs,
        out_specs=pl.BlockSpec((tm, tn), lambda i, j, k: (i, j)),
        scratch_shapes=[pltpu.VMEM((tm, tn), jnp.float32)],
        compiler_params=pltpu.CompilerParams(
            dimension_semantics=("parallel", "parallel", "arbitrary"),
            vmem_limit_bytes=VMEM_LIMIT),
    )(*args)


def _make_conv3x3_kernel(Ho, Wo, tn, apply_relu, stride):
    """3x3 conv as 9 accumulated in-kernel matmuls over shifted windows."""
    def epilogue(acc, s_ref, b_ref, o_ref):
        out = acc * s_ref[...] + b_ref[...]
        if apply_relu:
            out = jnp.maximum(out, 0.0)
        o_ref[0] = out.reshape(Ho, Wo, tn).astype(o_ref.dtype)

    def accumulate(tap, w_ref):
        acc = jnp.zeros((Ho * Wo, tn), jnp.float32)
        for kh in range(3):
            for kw in range(3):
                win = tap(kh, kw)                       # (Ho, Wo, Cin) bf16
                acc = acc + jnp.dot(win.reshape(Ho * Wo, win.shape[-1]),
                                    w_ref[kh, kw],
                                    preferred_element_type=jnp.float32)
        return acc

    if stride == 1:
        def kernel(x_ref, w_ref, s_ref, b_ref, o_ref):
            def tap(kh, kw):
                return x_ref[0, kh:kh + Ho, kw:kw + Wo, :]
            epilogue(accumulate(tap, w_ref), s_ref, b_ref, o_ref)
    else:  # stride == 2: four space-to-depth phases of the padded input
        def kernel(x00_ref, x01_ref, x10_ref, x11_ref, w_ref, s_ref, b_ref, o_ref):
            ph = ((x00_ref, x01_ref), (x10_ref, x11_ref))

            def tap(kh, kw):
                pref = ph[kh % 2][kw % 2]
                oh, ow = kh // 2, kw // 2
                return pref[0, oh:oh + Ho, ow:ow + Wo, :]
            epilogue(accumulate(tap, w_ref), s_ref, b_ref, o_ref)
    return kernel


def conv3x3_bn(x_nhwc, w, scale, bias, stride=1, relu=True):
    """Fused 3x3 conv (padding=1) + BN + ReLU; no HBM im2col."""
    N, H, W, Cin = x_nhwc.shape
    Cout = w.shape[-1]
    Ho = (H + 2 - 3) // stride + 1
    Wo = (W + 2 - 3) // stride + 1
    xp = jnp.pad(x_nhwc, ((0, 0), (1, 1), (1, 1), (0, 0)))

    s2 = scale.reshape(1, Cout).astype(jnp.float32)
    b2 = bias.reshape(1, Cout).astype(jnp.float32)
    tn = 256 if Cout % 256 == 0 else 128
    grid = (N, Cout // tn)

    w_specs = [
        pl.BlockSpec((3, 3, Cin, tn), lambda n, j: (0, 0, 0, j)),
        pl.BlockSpec((1, tn), lambda n, j: (0, j)),
        pl.BlockSpec((1, tn), lambda n, j: (0, j)),
    ]
    if stride == 1:
        args = [xp, w, s2, b2]
        in_specs = [pl.BlockSpec((1, H + 2, W + 2, Cin),
                                 lambda n, j: (n, 0, 0, 0))] + w_specs
    elif stride == 2:
        phases = [xp[:, a::2, b::2, :] for a in (0, 1) for b in (0, 1)]
        args = phases + [w, s2, b2]
        in_specs = [pl.BlockSpec((1,) + tuple(p.shape[1:]),
                                 lambda n, j: (n, 0, 0, 0)) for p in phases]
        in_specs += w_specs
    else:
        raise NotImplementedError("conv3x3_bn: stride must be 1 or 2")

    # TODO(synk): Cin (K) and spatial H are not tiled inside this kernel; fine
    #             for bLVNet-size feature maps, add a reduction axis for huge C*H*W.
    return pl.pallas_call(
        _make_conv3x3_kernel(Ho, Wo, tn, relu, stride),
        out_shape=jax.ShapeDtypeStruct((N, Ho, Wo, Cout), jnp.bfloat16),
        grid=grid,
        in_specs=in_specs,
        out_specs=pl.BlockSpec((1, Ho, Wo, tn), lambda n, j: (n, 0, 0, j)),
        compiler_params=pltpu.CompilerParams(
            dimension_semantics=("parallel", "parallel"),
            vmem_limit_bytes=VMEM_LIMIT),
    )(*args)


def _tam_kernel(xp_ref, xc_ref, xn_ref, wp_ref, wc_ref, wn_ref, o_ref):
    t = pl.program_id(1)
    pm = jnp.where(t > 0, 1.0, 0.0)                        # zero-pad at clip start
    nm = jnp.where(t < pl.num_programs(1) - 1, 1.0, 0.0)   # zero-pad at clip end
    x_p = xp_ref[0, 0].astype(jnp.float32)
    x_c = xc_ref[0, 0].astype(jnp.float32)
    x_n = xn_ref[0, 0].astype(jnp.float32)
    out = (wc_ref[...] * x_c
           + pm * (wp_ref[...] * x_p)
           + nm * (wn_ref[...] * x_n))
    o_ref[0, 0] = jnp.maximum(out, 0.0).astype(o_ref.dtype)


def tam_forward(x_nhwc, w_prev, w_curr, w_next, duration):
    """TAM (blending_frames=3): depthwise 1x1 convs + temporal shift + sum + ReLU."""
    N, H, W, C = x_nhwc.shape
    B = N // duration
    T = duration
    HW = H * W
    xr = x_nhwc.reshape(B, T, HW, C)

    def x_spec(imap):
        return pl.BlockSpec((1, 1, HW, C), imap)

    w_spec = pl.BlockSpec((1, C), lambda b, t: (0, 0))

    out = pl.pallas_call(
        _tam_kernel,
        out_shape=jax.ShapeDtypeStruct((B, T, HW, C), jnp.bfloat16),
        grid=(B, T),
        in_specs=[
            x_spec(lambda b, t: (b, jnp.maximum(t - 1, 0), 0, 0)),
            x_spec(lambda b, t: (b, t, 0, 0)),
            x_spec(lambda b, t: (b, jnp.minimum(t + 1, T - 1), 0, 0)),
            w_spec, w_spec, w_spec,
        ],
        out_specs=pl.BlockSpec((1, 1, HW, C), lambda b, t: (b, t, 0, 0)),
        compiler_params=pltpu.CompilerParams(
            dimension_semantics=("parallel", "parallel"),
            vmem_limit_bytes=VMEM_LIMIT),
    )(xr, xr, xr,
      w_prev.reshape(1, C).astype(jnp.float32),
      w_curr.reshape(1, C).astype(jnp.float32),
      w_next.reshape(1, C).astype(jnp.float32))
    return out.reshape(N, H, W, C)


# ---------------------------------------------------------------------------
# Glue (layout plumbing, pooling, parameter setup) -- plain JAX
# ---------------------------------------------------------------------------

def fold_bn(gamma, beta, mean, var, eps=1e-5):
    scale = gamma / jnp.sqrt(var + eps)
    return scale, beta - mean * scale


def conv1x1_bn(x_nhwc, w, scale, bias, residual=None, relu=False):
    N, H, W, Cin = x_nhwc.shape
    Cout = w.shape[1]
    xm = x_nhwc.reshape(N * H * W, Cin)
    rm = None if residual is None else residual.reshape(N * H * W, Cout)
    out = matmul_bn(xm, w, scale, bias, rm, relu)
    return out.reshape(N, H, W, Cout)


def avgpool_3x3_s2_p1(x_nhwc):
    # nn.AvgPool2d(3, stride=2, padding=1), count_include_pad=True.
    # TODO(synk): left in plain XLA -- cold identity/downsample path only.
    N, H, W, C = x_nhwc.shape
    Ho = (H + 2 - 3) // 2 + 1
    Wo = (W + 2 - 3) // 2 + 1
    xp = jnp.pad(x_nhwc, ((0, 0), (1, 1), (1, 1), (0, 0)))
    acc = jnp.zeros((N, Ho, Wo, C), jnp.float32)
    for kh in range(3):
        for kw in range(3):
            acc = acc + xp[:, kh:kh + 2 * (Ho - 1) + 1:2,
                           kw:kw + 2 * (Wo - 1) + 1:2, :].astype(jnp.float32)
    return (acc / 9.0).astype(jnp.bfloat16)


def nearest_resize(x_nhwc, Ho, Wo):
    # F.interpolate(..., mode='nearest'): idx = floor(i * in / out)
    # TODO(synk): could be folded into the merge matmul via a scalar-prefetched
    #             gather index_map; kept as a single XLA gather for clarity.
    N, H, W, C = x_nhwc.shape
    if (H, W) == (Ho, Wo):
        return x_nhwc
    hi = (jnp.arange(Ho) * H) // Ho
    wi = (jnp.arange(Wo) * W) // Wo
    return x_nhwc[:, hi][:, :, wi]


# --------------------------- parameter init --------------------------------

def init_conv1x1(key, cin, cout):
    cin_p, cout_p = _round_up(cin, LANE), _round_up(cout, LANE)
    w = jax.random.normal(key, (cin, cout), jnp.float32) / jnp.sqrt(cin)
    w = jnp.pad(w, ((0, cin_p - cin), (0, cout_p - cout)))
    return w.astype(jnp.bfloat16)                          # (cin_p, cout_p)


def init_conv3x3(key, cin, cout):
    cin_p, cout_p = _round_up(cin, LANE), _round_up(cout, LANE)
    w = jax.random.normal(key, (3, 3, cin, cout), jnp.float32) / jnp.sqrt(9.0 * cin)
    w = jnp.pad(w, ((0, 0), (0, 0), (0, cin_p - cin), (0, cout_p - cout)))
    return w.astype(jnp.bfloat16)                          # (3, 3, cin_p, cout_p)


def init_bn(key, c):
    c_p = _round_up(c, LANE)
    k1, k2 = jax.random.split(key)
    gamma = 1.0 + 0.1 * jax.random.normal(k1, (c,), jnp.float32)
    beta = 0.1 * jax.random.normal(k2, (c,), jnp.float32)
    mean = jnp.zeros((c,), jnp.float32)
    var = jnp.ones((c,), jnp.float32)
    scale, bias = fold_bn(gamma, beta, mean, var)
    # padded channels get scale = bias = 0 so they stay exactly zero end-to-end
    return jnp.pad(scale, (0, c_p - c)), jnp.pad(bias, (0, c_p - c))


def init_bottleneck(key, inplanes, planes, stride=1, has_downsample=False,
                    last_relu=True):
    mid = planes // 4                                      # Bottleneck.expansion = 4
    keys = jax.random.split(key, 8)
    p = {
        'stride': stride, 'last_relu': last_relu,
        'w1': init_conv1x1(keys[0], inplanes, mid), 'bn1': init_bn(keys[1], mid),
        'w2': init_conv3x3(keys[2], mid, mid),      'bn2': init_bn(keys[3], mid),
        'w3': init_conv1x1(keys[4], mid, planes),   'bn3': init_bn(keys[5], planes),
        'ds_avgpool': False, 'ds_w': None, 'ds_bn': None,
    }
    if has_downsample:
        p['ds_avgpool'] = (stride != 1)
        if inplanes != planes:
            p['ds_w'] = init_conv1x1(keys[6], inplanes, planes)
            p['ds_bn'] = init_bn(keys[7], planes)
    return p


def bottleneck_forward(x, p):
    out = conv1x1_bn(x, p['w1'], *p['bn1'], relu=True)
    out = conv3x3_bn(out, p['w2'], *p['bn2'], stride=p['stride'], relu=True)
    r = x
    if p['ds_avgpool']:
        r = avgpool_3x3_s2_p1(r)
    if p['ds_w'] is not None:
        r = conv1x1_bn(r, p['ds_w'], *p['ds_bn'], relu=False)
    # residual add + (optional) ReLU fused into the last matmul's epilogue
    return conv1x1_bn(out, p['w3'], *p['bn3'], residual=r, relu=p['last_relu'])


def init_bl_module(key, in_channels, out_channels, blocks, alpha, beta,
                   stride, num_frames, blending_frames=3):
    assert blending_frames == 3
    cin_p = _round_up(in_channels, LANE)
    keys = jax.random.split(key, 8)
    params = {'num_frames': num_frames, 'in_channels': in_channels,
              'out_channels': out_channels, 'cin_pad': cin_p}

    tkeys = jax.random.split(keys[0], 3)

    def tam_w(k):
        w = 0.5 * jax.random.normal(k, (in_channels,), jnp.float32)
        return jnp.pad(w, (0, cin_p - in_channels)).reshape(1, cin_p)

    params['tam'] = {'w_prev': tam_w(tkeys[0]), 'w_curr': tam_w(tkeys[1]),
                     'w_next': tam_w(tkeys[2])}

    # big: (blocks - 1) bottlenecks, first has stride=2 + downsample,
    # last has last_relu=False (only when the layer has > 1 block).
    nb = blocks - 1
    bkeys = jax.random.split(keys[1], max(nb, 1))
    big = [init_bottleneck(bkeys[0], in_channels, out_channels, stride=2,
                           has_downsample=True, last_relu=True)]
    for i in range(1, nb):
        big.append(init_bottleneck(bkeys[i], out_channels, out_channels,
                                   last_relu=(False if i == nb - 1 else True)))
    params['big'] = big

    # little: max(1, blocks // beta - 1) bottlenecks at out_channels // alpha
    lp = out_channels // alpha
    nl = max(1, blocks // beta - 1)
    lkeys = jax.random.split(keys[2], nl)
    little = [init_bottleneck(lkeys[0], in_channels, lp, stride=1,
                              has_downsample=(in_channels != lp))]
    for i in range(1, nl):
        little.append(init_bottleneck(lkeys[i], lp, lp))
    params['little'] = little

    params['little_e_w'] = init_conv1x1(keys[3], lp, out_channels)
    params['little_e_bn'] = init_bn(keys[4], out_channels)

    params['fusion'] = [init_bottleneck(keys[5], out_channels, out_channels,
                                        stride=stride,
                                        has_downsample=(stride != 1))]
    return params


# ----------------------------- forward -------------------------------------

def bl_module_forward(params, x_nchw, big_frame_num, big_list,
                      little_frame_num, little_list):
    n = x_nchw.shape[0]
    cin, cin_p = params['in_channels'], params['cin_pad']

    # NCHW -> NHWC once; zero-pad channels to a lane-dense multiple of 128; bf16.
    x_nhwc = jnp.transpose(x_nchw, (0, 2, 3, 1)).astype(jnp.bfloat16)
    if cin_p != cin:
        x_nhwc = jnp.pad(x_nhwc, ((0, 0), (0, 0), (0, 0), (0, cin_p - cin)))

    t = params['tam']
    x_nhwc = tam_forward(x_nhwc, t['w_prev'], t['w_curr'], t['w_next'],
                         params['num_frames'])

    big = x_nhwc[jnp.asarray(big_list)]
    for p in params['big']:
        big = bottleneck_forward(big, p)

    little = x_nhwc[jnp.asarray(little_list)]
    for p in params['little']:
        little = bottleneck_forward(little, p)

    # F.interpolate(big, little.shape[2:]) -> nearest upsample of big
    Hl, Wl = little.shape[1:3]
    big_up = nearest_resize(big, Hl, Wl)

    # big += little_e(little); relu  --  fused into the little_e matmul epilogue
    # (the 1x1 conv is pointwise, so broadcasting little across the big frames
    #  before the conv is equivalent to broadcasting its output, as in PyTorch).
    Cl = little.shape[-1]
    littlev = little.reshape(-1, little_frame_num, Hl, Wl, Cl)
    littlev = jnp.broadcast_to(
        littlev, (littlev.shape[0], big_frame_num) + littlev.shape[2:])
    big_rows = big_up.reshape(-1, big_up.shape[-1])
    merged = matmul_bn(littlev.reshape(-1, Cl), params['little_e_w'],
                       *params['little_e_bn'], residual=big_rows, relu=True)
    merged = merged.reshape(-1, Hl, Wl, merged.shape[-1])

    out = merged
    for p in params['fusion']:
        out = bottleneck_forward(out, p)

    out = out[..., :params['out_channels']]                # drop channel padding
    out_nchw = jnp.transpose(out, (0, 3, 1, 2)).astype(jnp.float32)

    # x[0::2] = out ; x[1::2] = out  ->  interleaved duplication (no scatter)
    if n == 2 * out_nchw.shape[0]:
        full = jnp.stack([out_nchw, out_nchw], axis=1)
        full = full.reshape((n,) + out_nchw.shape[1:])
    else:
        full = jnp.zeros((n,) + out_nchw.shape[1:], out_nchw.dtype)
        full = full.at[jnp.arange(0, n, 2)].set(out_nchw)
        full = full.at[jnp.arange(1, n, 2)].set(out_nchw)
    return full


# ---------------------------------------------------------------------------

if __name__ == "__main__":
    key = jax.random.PRNGKey(0)
    k_param, k_x = jax.random.split(key)

    num_frames = 8
    in_channels, out_channels = 16, 32
    blocks, alpha, beta, stride = 3, 2, 4, 1
    H = W = 16
    N = num_frames                        # one clip of num_frames frames

    params = init_bl_module(k_param, in_channels, out_channels, blocks,
                            alpha, beta, stride, num_frames,
                            blending_frames=3)

    x = jax.random.normal(k_x, (N, in_channels, H, W), jnp.float32)
    big_list = list(range(0, N, 2))
    little_list = list(range(1, N, 2))
    big_frame_num = len(big_list)
    little_frame_num = len(little_list)

    out = bl_module_forward(params, x, big_frame_num, big_list,
                            little_frame_num, little_list)
    jax.block_until_ready(out)
    assert out.shape == (N, out_channels, H, W), out.shape
    assert bool(jnp.all(jnp.isfinite(out)))
    print("KERNEL_OK")
</pallas_src>

<mosaic_0001>
module attributes {stable_mosaic.version = 11 : i64} {
  func.func @_tam_kernel(%arg0: i32, %arg1: i32, %arg2: memref<1x1x256x128xbf16, #tpu.memory_space<vmem>>, %arg3: memref<1x1x256x128xbf16, #tpu.memory_space<vmem>>, %arg4: memref<1x1x256x128xbf16, #tpu.memory_space<vmem>>, %arg5: memref<1x128xf32, #tpu.memory_space<vmem>>, %arg6: memref<1x128xf32, #tpu.memory_space<vmem>>, %arg7: memref<1x128xf32, #tpu.memory_space<vmem>>, %arg8: memref<1x1x256x128xbf16, #tpu.memory_space<vmem>>) attributes {dimension_semantics = [#tpu.dimension_semantics<parallel>, #tpu.dimension_semantics<parallel>], iteration_bounds = array<i64: 1, 8>, scalar_prefetch = 0 : i64, scratch_operands = 0 : i64, tpu.core_type = #tpu.core_type<tc>, window_params = [{transform_indices = @transform_0, window_bounds = array<i64: 1, 1, 256, 128>}, {transform_indices = @transform_1, window_bounds = array<i64: 1, 1, 256, 128>}, {transform_indices = @transform_2, window_bounds = array<i64: 1, 1, 256, 128>}, {pipeline_mode = #tpu.pipeline_mode<synchronous>, transform_indices = @transform_3, window_bounds = array<i64: 1, 128>}, {pipeline_mode = #tpu.pipeline_mode<synchronous>, transform_indices = @transform_4, window_bounds = array<i64: 1, 128>}, {pipeline_mode = #tpu.pipeline_mode<synchronous>, transform_indices = @transform_5, window_bounds = array<i64: 1, 128>}, {transform_indices = @transform_6, window_bounds = array<i64: 1, 1, 256, 128>}]} {
    %c0_i32 = arith.constant 0 : i32
    %0 = arith.cmpi sgt, %arg1, %c0_i32 : i32
    %cst = arith.constant 1.000000e+00 : f32
    %cst_0 = arith.constant 0.000000e+00 : f32
    %1 = arith.select %0, %cst, %cst_0 : f32
    %c7_i32 = arith.constant 7 : i32
    %2 = arith.cmpi slt, %arg1, %c7_i32 : i32
    %cst_1 = arith.constant 1.000000e+00 : f32
    %cst_2 = arith.constant 0.000000e+00 : f32
    %3 = arith.select %2, %cst_1, %cst_2 : f32
    %c0 = arith.constant 0 : index
    %c0_3 = arith.constant 0 : index
    %c0_4 = arith.constant 0 : index
    %c0_5 = arith.constant 0 : index
    %4 = vector.load %arg2[%c0, %c0_3, %c0_4, %c0_5] : memref<1x1x256x128xbf16, #tpu.memory_space<vmem>>, vector<1x1x256x128xbf16>
    %5 = vector.shape_cast %4 : vector<1x1x256x128xbf16> to vector<256x128xbf16>
    %6 = arith.extf %5 : vector<256x128xbf16> to vector<256x128xf32>
    %c0_6 = arith.constant 0 : index
    %c0_7 = arith.constant 0 : index
    %c0_8 = arith.constant 0 : index
    %c0_9 = arith.constant 0 : index
    %7 = vector.load %arg3[%c0_6, %c0_7, %c0_8, %c0_9] : memref<1x1x256x128xbf16, #tpu.memory_space<vmem>>, vector<1x1x256x128xbf16>
    %8 = vector.shape_cast %7 : vector<1x1x256x128xbf16> to vector<256x128xbf16>
    %9 = arith.extf %8 : vector<256x128xbf16> to vector<256x128xf32>
    %c0_10 = arith.constant 0 : index
    %c0_11 = arith.constant 0 : index
    %c0_12 = arith.constant 0 : index
    %c0_13 = arith.constant 0 : index
    %10 = vector.load %arg4[%c0_10, %c0_11, %c0_12, %c0_13] : memref<1x1x256x128xbf16, #tpu.memory_space<vmem>>, vector<1x1x256x128xbf16>
    %11 = vector.shape_cast %10 : vector<1x1x256x128xbf16> to vector<256x128xbf16>
    %12 = arith.extf %11 : vector<256x128xbf16> to vector<256x128xf32>
    %c0_14 = arith.constant 0 : index
    %c0_15 = arith.constant 0 : index
    %13 = vector.load %arg6[%c0_14, %c0_15] : memref<1x128xf32, #tpu.memory_space<vmem>>, vector<1x128xf32>
    %14 = vector.broadcast %13 : vector<1x128xf32> to vector<256x128xf32>
    %15 = arith.mulf %14, %9 : vector<256x128xf32>
    %c0_16 = arith.constant 0 : index
    %c0_17 = arith.constant 0 : index
    %16 = vector.load %arg5[%c0_16, %c0_17] : memref<1x128xf32, #tpu.memory_space<vmem>>, vector<1x128xf32>
    %17 = vector.broadcast %16 : vector<1x128xf32> to vector<256x128xf32>
    %18 = arith.mulf %17, %6 : vector<256x128xf32>
    %19 = vector.broadcast %1 : f32 to vector<256x128xf32>
    %20 = arith.mulf %19, %18 : vector<256x128xf32>
    %21 = arith.addf %15, %20 : vector<256x128xf32>
    %c0_18 = arith.constant 0 : index
    %c0_19 = arith.constant 0 : index
    %22 = vector.load %arg7[%c0_18, %c0_19] : memref<1x128xf32, #tpu.memory_space<vmem>>, vector<1x128xf32>
    %23 = vector.broadcast %22 : vector<1x128xf32> to vector<256x128xf32>
    %24 = arith.mulf %23, %12 : vector<256x128xf32>
    %25 = vector.broadcast %3 : f32 to vector<256x128xf32>
    %26 = arith.mulf %25, %24 : vector<256x128xf32>
    %27 = arith.addf %21, %26 : vector<256x128xf32>
    %cst_20 = arith.constant 0.000000e+00 : f32
    %28 = vector.broadcast %cst_20 : f32 to vector<256x128xf32>
    %29 = arith.maximumf %27, %28 : vector<256x128xf32>
    %30 = arith.truncf %29 : vector<256x128xf32> to vector<256x128xbf16>
    %c0_21 = arith.constant 0 : index
    %c0_22 = arith.constant 0 : index
    %c0_23 = arith.constant 0 : index
    %c0_24 = arith.constant 0 : index
    %31 = vector.load %arg8[%c0_21, %c0_22, %c0_23, %c0_24] : memref<1x1x256x128xbf16, #tpu.memory_space<vmem>>, vector<1x1x256x128xbf16>
    %32 = vector.shape_cast %31 : vector<1x1x256x128xbf16> to vector<256x128xbf16>
    %33 = vector.shape_cast %30 : vector<256x128xbf16> to vector<1x1x256x128xbf16>
    tpu.vector_store %arg8[%c0_21, %c0_22, %c0_23, %c0_24], %33 {strides = array<i32>} : memref<1x1x256x128xbf16, #tpu.memory_space<vmem>>, vector<1x1x256x128xbf16>,
    return
  }
  func.func @transform_0(%arg0: i32, %arg1: i32) -> (i32, i32, i32, i32) {
    %c1_i32 = arith.constant 1 : i32
    %0 = arith.subi %arg1, %c1_i32 : i32
    %c0_i32 = arith.constant 0 : i32
    %1 = arith.maxsi %0, %c0_i32 : i32
    %c0_i32_0 = arith.constant 0 : i32
    %c0_i32_1 = arith.constant 0 : i32
    %c0_i32_2 = arith.constant 0 : i32
    return %arg0, %1, %c0_i32_0, %c0_i32_1 : i32, i32, i32, i32
  }
  func.func @transform_1(%arg0: i32, %arg1: i32) -> (i32, i32, i32, i32) {
    %c0_i32 = arith.constant 0 : i32
    %c0_i32_0 = arith.constant 0 : i32
    %c0_i32_1 = arith.constant 0 : i32
    return %arg0, %arg1, %c0_i32, %c0_i32_0 : i32, i32, i32, i32
  }
  func.func @transform_2(%arg0: i32, %arg1: i32) -> (i32, i32, i32, i32) {
    %c1_i32 = arith.constant 1 : i32
    %0 = arith.addi %arg1, %c1_i32 : i32
    %c7_i32 = arith.constant 7 : i32
    %1 = arith.minsi %0, %c7_i32 : i32
    %c0_i32 = arith.constant 0 : i32
    %c0_i32_0 = arith.constant 0 : i32
    %c0_i32_1 = arith.constant 0 : i32
    return %arg0, %1, %c0_i32, %c0_i32_0 : i32, i32, i32, i32
  }
  func.func @transform_3(%arg0: i32, %arg1: i32) -> (i32, i32) {
    %c0_i32 = arith.constant 0 : i32
    %c0_i32_0 = arith.constant 0 : i32
    %c0_i32_1 = arith.constant 0 : i32
    return %c0_i32, %c0_i32_0 : i32, i32
  }
  func.func @transform_4(%arg0: i32, %arg1: i32) -> (i32, i32) {
    %c0_i32 = arith.constant 0 : i32
    %c0_i32_0 = arith.constant 0 : i32
    %c0_i32_1 = arith.constant 0 : i32
    return %c0_i32, %c0_i32_0 : i32, i32
  }
  func.func @transform_5(%arg0: i32, %arg1: i32) -> (i32, i32) {
    %c0_i32 = arith.constant 0 : i32
    %c0_i32_0 = arith.constant 0 : i32
    %c0_i32_1 = arith.constant 0 : i32
    return %c0_i32, %c0_i32_0 : i32, i32
  }
  func.func @transform_6(%arg0: i32, %arg1: i32) -> (i32, i32, i32, i32) {
    %c0_i32 = arith.constant 0 : i32
    %c0_i32_0 = arith.constant 0 : i32
    %c0_i32_1 = arith.constant 0 : i32
    return %arg0, %arg1, %c0_i32, %c0_i32_0 : i32, i32, i32, i32
  }
}

</mosaic_0001>

<llo_original>
// kernel: tpu_custom_call.1
$region0: #{tpu_custom_call.1}
  #allocation0 [shape = 'u32[]', space=smem, size = 0x4, offset = 0x4, fixed_abs, tag = 'smem constant byte address 0x4 - core index']
  #allocation1 [shape = 'u32[144,128]{1,0:T(1,128)}', space=vmem, size = 0x12000, scoped, tag = 'internal scratch']
  %s0 = inlined_call_operand.hbm [shape: bf16[1,8,256,128], index: 0, kind: input, shape index: {}]
  %s1 = inlined_call_operand.hbm [shape: bf16[1,8,256,128], index: 1, kind: input, shape index: {}]
  %s2 = inlined_call_operand.hbm [shape: bf16[1,8,256,128], index: 2, kind: input, shape index: {}]
  %s3 = inlined_call_operand.vmem [shape: f32[1,128], index: 3, kind: input, shape index: {}]
  %s4 = inlined_call_operand.vmem [shape: f32[1,128], index: 4, kind: input, shape index: {}]
  %s5 = inlined_call_operand.vmem [shape: f32[1,128], index: 5, kind: input, shape index: {}]
  %s6 = inlined_call_operand.hbm [shape: bf16[1,8,256,128], index: 6, kind: output, shape index: {}]
  %s7 = sld [smem:[#allocation0]]
  $region69: #{tpu_custom_call.1} parent=0
    _
  %s9 = ssub.s32 1, %s7
  %s10 = scalar_select 0, %s9, %s7
  $region1: #{tpu_custom_call.1} parent=0
    #allocation2 [shape = 'u8[131072]{0}', space=vmem, size = 0x20000, scoped, tag = 'input window, operand 0']
    #allocation3 [shape = 's32[2]{0}', space=sflag, size = 0x8, scoped, tag = 'scoped memory for tpu_custom_call.1']
    #allocation4 [shape = 's32[2]{0}', space=sflag, size = 0x8, scoped, tag = 'scoped memory for tpu_custom_call.1']
    #allocation5 [shape = 'u8[131072]{0}', space=vmem, size = 0x20000, scoped, tag = 'input window, operand 1']
    #allocation6 [shape = 's32[2]{0}', space=sflag, size = 0x8, scoped, tag = 'scoped memory for tpu_custom_call.1']
    #allocation7 [shape = 'u8[131072]{0}', space=vmem, size = 0x20000, scoped, tag = 'input window, operand 2']
    #allocation8 [shape = 'u8[131072]{0}', space=vmem, size = 0x20000, scoped, tag = 'output window, operand 0']
    %11 = vsyncpa [#allocation3], 0
    %s12 = scalar_lea.sflag [#allocation3], 1
    %13 = vsyncpa %s12, 0
    %14 = vsyncpa [#allocation6], 0
    %s15 = scalar_lea.sflag [#allocation6], 1
    %16 = vsyncpa %s15, 0
    %17 = vsyncpa [#allocation4], 0
    %s18 = scalar_lea.sflag [#allocation4], 1
    %19 = vsyncpa %s18, 0
    loop: start=0, step=1, limit=10
    $region2: #{tpu_custom_call.1} parent=1 // loop_pre_header
      _
    $region3: #{tpu_custom_call.1} parent=1 // loop_header
      %s21 = sphi 0, %s25
      %p22 = scmp.ge.s32.totalorder %s21, 10
      %s28 = sphi 0, %s40
      %s29 = sphi 0, %s36
      %s30 = sphi 0, %s28
      %s31 = sphi 0, %s29
      %s32 = sphi 0, %s30
      %s33 = sphi 0, %s31
      %s51 = sphi 0, %s53
      %s54 = sphi 0, %s51
      %s55 = sphi 0, %s54
      %s71 = sphi 0, %s55
      %s79 = sphi 0, %s81
      %s82 = sphi 0, %s79
      %s83 = sphi 0, %s82
      %s99 = sphi 0, %s83
      %s113 = sphi 0, %s115
      %s116 = sphi 0, %s113
      %s117 = sphi 0, %s116
      %s133 = sphi 0, %s117
      %s137 = sphi 0, %s137
      %s139 = sphi 0, %s137
      %s140 = sphi 0, %s139
      %s154 = sphi 0, %s140
      %s158 = sphi 0, %s158
      %s160 = sphi 0, %s158
      %s161 = sphi 0, %s160
      %s175 = sphi 0, %s161
      %s179 = sphi 0, %s179
      %s181 = sphi 0, %s179
      %s182 = sphi 0, %s181
      %s196 = sphi 0, %s182
      %s204 = sphi 0, %s206
      %s207 = sphi 0, %s204
      %s208 = sphi 0, %s207
      %s224 = sphi 0, %s208
    $region4: #{tpu_custom_call.1} parent=1 // loop_header_branch
      %24 = sbr.rel (%p22) target = $region8
    $region5: #{tpu_custom_call.1} parent=1 // loop_body
      %s26 = ssub.s32 %s21, 1
      %s27 = ssub.s32 %s21, 2
      %s34 = sadd.s32 1, %s29
      %p35 = scmp.ge.s32.totalorder %s34, 8
      %s36 = scalar_select %p35, 0, %s34
      %s37 = sadd.s32 1, %s28
      %s38 = scalar_select %p35, %s37, %s28
      %p39 = scmp.ge.s32.totalorder %s38, 1
      %s40 = scalar_select %p39, 0, %s38
      %s41 = ssub.s32 %s29, 1
      %p42 = scmp.gt.s32.totalorder %s41, 0
      %s43 = scalar_select %p42, %s41, 0
      %s44 = ssub.s32 %s36, 1
      %p45 = scmp.gt.s32.totalorder %s44, 0
      %s46 = scalar_select %p45, %s44, 0
      %s47 = ssub.s32 %s28, %s40
      %s48 = ssub.s32 %s43, %s46
      %s49 = sor.u32 %s47, %s48
      %p50 = scmp.eq.s32.totalorder %s49, 0
      %s52 = sadd.s32 %s51, 1
      %s53 = scalar_select %p50, %s51, %s52
      %p56 = pneg %p50
      %p57 = scmp.eq.s32.totalorder %s21, 7
      %p58 = por %p56, %p57
      %p59 = scmp.ne.s32.totalorder %s51, %s54
      %p60 = scmp.eq.s32.totalorder %s21, 0
      %p61 = por %p59, %p60
      %p62 = scmp.ne.s32.totalorder %s51, %s54
      %p63 = scmp.eq.s32.totalorder %s26, 7
      %p64 = por %p62, %p63
      %p65 = scmp.ne.s32.totalorder %s54, %s55
      %p66 = scmp.eq.s32.totalorder %s26, 0
      %p67 = por %p65, %p66
      %p68 = scmp.ne.s32.totalorder %s54, %s55
      %p69 = scmp.eq.s32.totalorder %s27, 7
      %p70 = por %p68, %p69
      %p72 = scmp.ne.s32.totalorder %s55, %s71
      %p73 = scmp.eq.s32.totalorder %s27, 0
      %p74 = por %p72, %p73
      %s75 = ssub.s32 %s28, %s40
      %s76 = ssub.s32 %s29, %s36
      %s77 = sor.u32 %s75, %s76
      %p78 = scmp.eq.s32.totalorder %s77, 0
      %s80 = sadd.s32 %s79, 1
      %s81 = scalar_select %p78, %s79, %s80
      %p84 = pneg %p78
      %p85 = scmp.eq.s32.totalorder %s21, 7
      %p86 = por %p84, %p85
      %p87 = scmp.ne.s32.totalorder %s79, %s82
      %p88 = scmp.eq.s32.totalorder %s21, 0
      %p89 = por %p87, %p88
      %p90 = scmp.ne.s32.totalorder %s79, %s82
      %p91 = scmp.eq.s32.totalorder %s26, 7
      %p92 = por %p90, %p91
      %p93 = scmp.ne.s32.totalorder %s82, %s83
      %p94 = scmp.eq.s32.totalorder %s26, 0
      %p95 = por %p93, %p94
      %p96 = scmp.ne.s32.totalorder %s82, %s83
      %p97 = scmp.eq.s32.totalorder %s27, 7
      %p98 = por %p96, %p97
      %p100 = scmp.ne.s32.totalorder %s83, %s99
      %p101 = scmp.eq.s32.totalorder %s27, 0
      %p102 = por %p100, %p101
      %s103 = sadd.s32 %s29, 1
      %p104 = scmp.lt.s32.totalorder %s103, 7
      %s105 = scalar_select %p104, %s103, 7
      %s106 = sadd.s32 %s36, 1
      %p107 = scmp.lt.s32.totalorder %s106, 7
      %s108 = scalar_select %p107, %s106, 7
      %s109 = ssub.s32 %s28, %s40
      %s110 = ssub.s32 %s105, %s108
      %s111 = sor.u32 %s109, %s110
      %p112 = scmp.eq.s32.totalorder %s111, 0
      %s114 = sadd.s32 %s113, 1
      %s115 = scalar_select %p112, %s113, %s114
      %p118 = pneg %p112
      %p119 = scmp.eq.s32.totalorder %s21, 7
      %p120 = por %p118, %p119
      %p121 = scmp.ne.s32.totalorder %s113, %s116
      %p122 = scmp.eq.s32.totalorder %s21, 0
      %p123 = por %p121, %p122
      %p124 = scmp.ne.s32.totalorder %s113, %s116
      %p125 = scmp.eq.s32.totalorder %s26, 7
      %p126 = por %p124, %p125
      %p127 = scmp.ne.s32.totalorder %s116, %s117
      %p128 = scmp.eq.s32.totalorder %s26, 0
      %p129 = por %p127, %p128
      %p130 = scmp.ne.s32.totalorder %s116, %s117
      %p131 = scmp.eq.s32.totalorder %s27, 7
      %p132 = por %p130, %p131
      %p134 = scmp.ne.s32.totalorder %s117, %s133
      %p135 = scmp.eq.s32.totalorder %s27, 0
      %p136 = por %p134, %p135
      %s138 = sadd.s32 %s137, 1
      %p141 = scmp.eq.s32.totalorder %s21, 7
      %p142 = scmp.ne.s32.totalorder %s137, %s139
      %p143 = scmp.eq.s32.totalorder %s21, 0
      %p144 = por %p142, %p143
      %p145 = scmp.ne.s32.totalorder %s137, %s139
      %p146 = scmp.eq.s32.totalorder %s26, 7
      %p147 = por %p145, %p146
      %p148 = scmp.ne.s32.totalorder %s139, %s140
      %p149 = scmp.eq.s32.totalorder %s26, 0
      %p150 = por %p148, %p149
      %p151 = scmp.ne.s32.totalorder %s139, %s140
      %p152 = scmp.eq.s32.totalorder %s27, 7
      %p153 = por %p151, %p152
      %p155 = scmp.ne.s32.totalorder %s140, %s154
      %p156 = scmp.eq.s32.totalorder %s27, 0
      %p157 = por %p155, %p156
      %s159 = sadd.s32 %s158, 1
      %p162 = scmp.eq.s32.totalorder %s21, 7
      %p163 = scmp.ne.s32.totalorder %s158, %s160
      %p164 = scmp.eq.s32.totalorder %s21, 0
      %p165 = por %p163, %p164
      %p166 = scmp.ne.s32.totalorder %s158, %s160
      %p167 = scmp.eq.s32.totalorder %s26, 7
      %p168 = por %p166, %p167
      %p169 = scmp.ne.s32.totalorder %s160, %s161
      %p170 = scmp.eq.s32.totalorder %s26, 0
      %p171 = por %p169, %p170
      %p172 = scmp.ne.s32.totalorder %s160, %s161
      %p173 = scmp.eq.s32.totalorder %s27, 7
      %p174 = por %p172, %p173
      %p176 = scmp.ne.s32.totalorder %s161, %s175
      %p177 = scmp.eq.s32.totalorder %s27, 0
      %p178 = por %p176, %p177
      %s180 = sadd.s32 %s179, 1
      %p183 = scmp.eq.s32.totalorder %s21, 7
      %p184 = scmp.ne.s32.totalorder %s179, %s181
      %p185 = scmp.eq.s32.totalorder %s21, 0
      %p186 = por %p184, %p185
      %p187 = scmp.ne.s32.totalorder %s179, %s181
      %p188 = scmp.eq.s32.totalorder %s26, 7
      %p189 = por %p187, %p188
      %p190 = scmp.ne.s32.totalorder %s181, %s182
      %p191 = scmp.eq.s32.totalorder %s26, 0
      %p192 = por %p190, %p191
      %p193 = scmp.ne.s32.totalorder %s181, %s182
      %p194 = scmp.eq.s32.totalorder %s27, 7
      %p195 = por %p193, %p194
      %p197 = scmp.ne.s32.totalorder %s182, %s196
      %p198 = scmp.eq.s32.totalorder %s27, 0
      %p199 = por %p197, %p198
      %s200 = ssub.s32 %s28, %s40
      %s201 = ssub.s32 %s29, %s36
      %s202 = sor.u32 %s200, %s201
      %p203 = scmp.eq.s32.totalorder %s202, 0
      %s205 = sadd.s32 %s204, 1
      %s206 = scalar_select %p203, %s204, %s205
      %p209 = pneg %p203
      %p210 = scmp.eq.s32.totalorder %s21, 7
      %p211 = por %p209, %p210
      %p212 = scmp.ne.s32.totalorder %s204, %s207
      %p213 = scmp.eq.s32.totalorder %s21, 0
      %p214 = por %p212, %p213
      %p215 = scmp.ne.s32.totalorder %s204, %s207
      %p216 = scmp.eq.s32.totalorder %s26, 7
      %p217 = por %p215, %p216
      %p218 = scmp.ne.s32.totalorder %s207, %s208
      %p219 = scmp.eq.s32.totalorder %s26, 0
      %p220 = por %p218, %p219
      %p221 = scmp.ne.s32.totalorder %s207, %s208
      %p222 = scmp.eq.s32.totalorder %s27, 7
      %p223 = por %p221, %p222
      %p225 = scmp.ne.s32.totalorder %s208, %s224
      %p226 = scmp.eq.s32.totalorder %s27, 0
      %p227 = por %p225, %p226
      %p228 = scmp.le.s32.totalorder 1, %s21
      %p229 = scmp.lt.s32.totalorder %s21, 9
      %p230 = pnand %p228, %p229
      %p231 = pneg %p230
      // Predicated region
      $region9: #{tpu_custom_call.1} parent=5 // pred_check
        _
      $region10: #{tpu_custom_call.1} parent=5 // pred_check_branch
        %233 = sbr.rel (%p230) target = $region12
      $region11: #{tpu_custom_call.1} parent=5 // pred_region
        %s234 = ssub.s32 %s21, 1
        // Predicated region
        $region13: #{tpu_custom_call.1} parent=11 // pred_check
          %p235 = pneg %p150
        $region14: #{tpu_custom_call.1} parent=11 // pred_check_branch
          %237 = sbr.rel (%p235) target = $region16
        $region15: #{tpu_custom_call.1} parent=11 // pred_region
          _
        $region16: #{tpu_custom_call.1} parent=11 // pred_fallthru
          _
        // Predicated region
        $region17: #{tpu_custom_call.1} parent=11 // pred_check
          %p238 = pneg %p171
        $region18: #{tpu_custom_call.1} parent=11 // pred_check_branch
          %240 = sbr.rel (%p238) target = $region20
        $region19: #{tpu_custom_call.1} parent=11 // pred_region
          _
        $region20: #{tpu_custom_call.1} parent=11 // pred_fallthru
          _
        // Predicated region
        $region21: #{tpu_custom_call.1} parent=11 // pred_check
          %p241 = pneg %p192
        $region22: #{tpu_custom_call.1} parent=11 // pred_check_branch
          %243 = sbr.rel (%p241) target = $region24
        $region23: #{tpu_custom_call.1} parent=11 // pred_region
          _
        $region24: #{tpu_custom_call.1} parent=11 // pred_fallthru
          _
      $region12: #{tpu_custom_call.1} parent=5 // pred_fallthru
        _
      %p244 = scmp.lt.s32.totalorder %s21, 8
      // Predicated region
      $region25: #{tpu_custom_call.1} parent=5 // pred_check
        %p245 = pneg %p244
      $region26: #{tpu_custom_call.1} parent=5 // pred_check_branch
        %247 = sbr.rel (%p245) target = $region28
      $region27: #{tpu_custom_call.1} parent=5 // pred_region
        // Predicated region
        $region29: #{tpu_custom_call.1} parent=27 // pred_check
          %p248 = pneg %p61
        $region30: #{tpu_custom_call.1} parent=27 // pred_check_branch
          %250 = sbr.rel (%p248) target = $region32
        $region31: #{tpu_custom_call.1} parent=27 // pred_region
          %s251 = sand.u32 %s51, 1
          %s252 = scalar_lea.sflag [#allocation3], %s251
          %s253 = sand.u32 %s51, 1
          %s254 = smul.addr %s253, 128
          %s255 = scalar_lea.vmem [#allocation2], %s254
          %s256 = ssub.s32 %s29, 1
          %p257 = scmp.gt.s32.totalorder %s256, 0
          %s258 = scalar_select %p257, %s256, 0
          %s260 = ssub.s32 2048, 2048
          %261 = vsyncadd %s252, %s260
          %s262 = smul.addr %s258, 32
          %s263 = smul.addr %s28, 256
          %s264 = sadd.s32 %s262, %s263
          %s265 = smul.addr %s264, 64
          %s266 = scalar_lea.hbm %s0, %s265
          %s267 = sshll.u32 %s255, 4
          %s268 = int_to_ptr.vmem [resolvable:$true] %s267
          %273 = dma.hbm_to_vmem [thread:$0]  %s266, 2048, %s268, %s252, 64, 64, 4
        $region32: #{tpu_custom_call.1} parent=27 // pred_fallthru
          _
        // Predicated region
        $region33: #{tpu_custom_call.1} parent=27 // pred_check
          %p274 = pneg %p89
        $region34: #{tpu_custom_call.1} parent=27 // pred_check_branch
          %276 = sbr.rel (%p274) target = $region36
        $region35: #{tpu_custom_call.1} parent=27 // pred_region
          %s277 = sand.u32 %s21, 1
          %s278 = scalar_lea.sflag [#allocation6], %s277
          %s279 = sand.u32 %s79, 1
          %s280 = smul.addr %s279, 128
          %s281 = scalar_lea.vmem [#allocation5], %s280
          %s283 = ssub.s32 2048, 2048
          %284 = vsyncadd %s278, %s283
          %s285 = smul.addr %s29, 32
          %s286 = smul.addr %s28, 256
          %s287 = sadd.s32 %s285, %s286
          %s288 = smul.addr %s287, 64
          %s289 = scalar_lea.hbm %s1, %s288
          %s290 = sshll.u32 %s281, 4
          %s291 = int_to_ptr.vmem [resolvable:$true] %s290
          %296 = dma.hbm_to_vmem [thread:$0]  %s289, 2048, %s291, %s278, 64, 64, 4
        $region36: #{tpu_custom_call.1} parent=27 // pred_fallthru
          _
        // Predicated region
        $region37: #{tpu_custom_call.1} parent=27 // pred_check
          %p297 = pneg %p123
        $region38: #{tpu_custom_call.1} parent=27 // pred_check_branch
          %299 = sbr.rel (%p297) target = $region40
        $region39: #{tpu_custom_call.1} parent=27 // pred_region
          %s300 = sand.u32 %s21, 1
          %s301 = scalar_lea.sflag [#allocation6], %s300
          %s302 = sand.u32 %s113, 1
          %s303 = smul.addr %s302, 128
          %s304 = scalar_lea.vmem [#allocation7], %s303
          %s305 = sadd.s32 %s29, 1
          %p306 = scmp.lt.s32.totalorder %s305, 7
          %s307 = scalar_select %p306, %s305, 7
          %s309 = ssub.s32 2048, 2048
          %310 = vsyncadd %s301, %s309
          %s311 = smul.addr %s307, 32
          %s312 = smul.addr %s28, 256
          %s313 = sadd.s32 %s311, %s312
          %s314 = smul.addr %s313, 64
          %s315 = scalar_lea.hbm %s2, %s314
          %s316 = sshll.u32 %s304, 4
          %s317 = int_to_ptr.vmem [resolvable:$true] %s316
          %322 = dma.hbm_to_vmem [thread:$0]  %s315, 2048, %s317, %s301, 64, 64, 4
        $region40: #{tpu_custom_call.1} parent=27 // pred_fallthru
          _
      $region28: #{tpu_custom_call.1} parent=5 // pred_fallthru
        _
      %p323 = scmp.le.s32.totalorder 1, %s21
      %p324 = scmp.lt.s32.totalorder %s21, 9
      %p325 = pnand %p323, %p324
      %p326 = pneg %p325
      // Predicated region
      $region41: #{tpu_custom_call.1} parent=5 // pred_check
        _
      $region42: #{tpu_custom_call.1} parent=5 // pred_check_branch
        %328 = sbr.rel (%p325) target = $region44
      $region43: #{tpu_custom_call.1} parent=5 // pred_region
        %s329 = ssub.s32 %s21, 1
        %s330 = sand.u32 %s54, 1
        %s331 = scalar_lea.sflag [#allocation3], %s330
        %s332 = sand.u32 %s54, 1
        %s333 = smul.addr %s332, 128
        %s334 = scalar_lea.vmem [#allocation2], %s333
        // Predicated region
        $region45: #{tpu_custom_call.1} parent=43 // pred_check
          %p335 = pneg %p67
        $region46: #{tpu_custom_call.1} parent=43 // pred_check_branch
          %337 = sbr.rel (%p335) target = $region48
        $region47: #{tpu_custom_call.1} parent=43 // pred_region
          %338 = dma.done %s331, 2048
        $region48: #{tpu_custom_call.1} parent=43 // pred_fallthru
          _
        %s339 = sand.u32 %s26, 1
        %s340 = scalar_lea.sflag [#allocation6], %s339
        %s341 = sand.u32 %s82, 1
        %s342 = smul.addr %s341, 128
        %s343 = scalar_lea.vmem [#allocation5], %s342
        // Predicated region
        $region49: #{tpu_custom_call.1} parent=43 // pred_check
          %p344 = pneg %p95
        $region50: #{tpu_custom_call.1} parent=43 // pred_check_branch
          %346 = sbr.rel (%p344) target = $region52
        $region51: #{tpu_custom_call.1} parent=43 // pred_region
          %347 = dma.done %s340, 2048
        $region52: #{tpu_custom_call.1} parent=43 // pred_fallthru
          _
        %s348 = sand.u32 %s26, 1
        %s349 = scalar_lea.sflag [#allocation6], %s348
        %s350 = sand.u32 %s116, 1
        %s351 = smul.addr %s350, 128
        %s352 = scalar_lea.vmem [#allocation7], %s351
        // Predicated region
        $region53: #{tpu_custom_call.1} parent=43 // pred_check
          %p353 = pneg %p129
        $region54: #{tpu_custom_call.1} parent=43 // pred_check_branch
          %355 = sbr.rel (%p353) target = $region56
        $region55: #{tpu_custom_call.1} parent=43 // pred_region
          %356 = dma.done %s349, 2048
        $region56: #{tpu_custom_call.1} parent=43 // pred_fallthru
          _
        %s357 = sand.u32 %s54, 1
        %s358 = scalar_lea.sflag [#allocation3], %s357
        %s359 = sand.u32 %s54, 1
        %s360 = smul.addr %s359, 128
        %s361 = scalar_lea.vmem [#allocation2], %s360
        %p362 = pneg %p67
        %p363 = pneg %p64
        %s364 = sand.u32 %s26, 1
        %s365 = scalar_lea.sflag [#allocation6], %s364
        %s366 = sand.u32 %s82, 1
        %s367 = smul.addr %s366, 128
        %s368 = scalar_lea.vmem [#allocation5], %s367
        %p369 = pneg %p95
        %p370 = pneg %p92
        %s371 = sand.u32 %s26, 1
        %s372 = scalar_lea.sflag [#allocation6], %s371
        %s373 = sand.u32 %s116, 1
        %s374 = smul.addr %s373, 128
        %s375 = scalar_lea.vmem [#allocation7], %s374
        %p376 = pneg %p129
        %p377 = pneg %p126
        %p378 = pneg %p150
        %p379 = pneg %p147
        %p380 = pneg %p171
        %p381 = pneg %p168
        %p382 = pneg %p192
        %p383 = pneg %p189
        %p384 = pneg %p220
        %p385 = pneg %p217
        %s386 = sand.u32 %s207, 1
        %s387 = scalar_lea.sflag [#allocation4], %s386
        %s388 = sand.u32 %s207, 1
        %s389 = smul.addr %s388, 128
        %s390 = scalar_lea.vmem [#allocation8], %s389
        %s391 = ssub.s32 %s31, 1
        %p392 = scmp.gt.s32.totalorder %s391, 0
        %s393 = scalar_select %p392, %s391, 0
        %s394 = sadd.s32 %s31, 1
        %p395 = scmp.lt.s32.totalorder %s394, 7
        %s396 = scalar_select %p395, %s394, 7
        %p397 = scmp.gt.s32.totalorder %s31, 0
        %s398 = scalar_select %p397, 1.0, 0.0
        %p399 = scmp.lt.s32.totalorder %s31, 7
        %s400 = scalar_select %p399, 1.0, 0.0
        %v401 = vld [vmem:[%s334] sm:$0xf]
        %v402 = vld [vmem:[%s334 + $0x4] sm:$0xf]
        %v403 = vld [vmem:[%s334 + $0x8] sm:$0xf]
        %v404 = vld [vmem:[%s334 + $0xc] sm:$0xf]
        %v405 = vld [vmem:[%s334 + $0x10] sm:$0xf]
        %v406 = vld [vmem:[%s334 + $0x14] sm:$0xf]
        %v407 = vld [vmem:[%s334 + $0x18] sm:$0xf]
        %v408 = vld [vmem:[%s334 + $0x1c] sm:$0xf]
        %v409 = vld [vmem:[%s334 + $0x20] sm:$0xf]
        %v410 = vld [vmem:[%s334 + $0x24] sm:$0xf]
        %v411 = vld [vmem:[%s334 + $0x28] sm:$0xf]
        %v412 = vld [vmem:[%s334 + $0x2c] sm:$0xf]
        %v413 = vld [vmem:[%s334 + $0x30] sm:$0xf]
        %v414 = vld [vmem:[%s334 + $0x34] sm:$0xf]
        %v415 = vld [vmem:[%s334 + $0x38] sm:$0xf]
        %v416 = vld [vmem:[%s334 + $0x3c] sm:$0xf]
        %v417 = vld [vmem:[%s334 + $0x40] sm:$0xf]
        %v418 = vld [vmem:[%s334 + $0x44] sm:$0xf]
        %v419 = vld [vmem:[%s334 + $0x48] sm:$0xf]
        %v420 = vld [vmem:[%s334 + $0x4c] sm:$0xf]
        %v421 = vld [vmem:[%s334 + $0x50] sm:$0xf]
        %v422 = vld [vmem:[%s334 + $0x54] sm:$0xf]
        %v423 = vld [vmem:[%s334 + $0x58] sm:$0xf]
        %v424 = vld [vmem:[%s334 + $0x5c] sm:$0xf]
        %v425 = vld [vmem:[%s334 + $0x60] sm:$0xf]
        %v426 = vld [vmem:[%s334 + $0x64] sm:$0xf]
        %v427 = vld [vmem:[%s334 + $0x68] sm:$0xf]
        %v428 = vld [vmem:[%s334 + $0x6c] sm:$0xf]
        %v429 = vld [vmem:[%s334 + $0x70] sm:$0xf]
        %v430 = vld [vmem:[%s334 + $0x74] sm:$0xf]
        %v431 = vld [vmem:[%s334 + $0x78] sm:$0xf]
        %v432 = vld [vmem:[%s334 + $0x7c] sm:$0xf]
        %v433 = vunpack.c.l.bf16 %v401
        %v434 = vunpack.c.l.bf16 %v402
        %v435 = vunpack.c.l.bf16 %v403
        %v436 = vunpack.c.l.bf16 %v404
        %v437 = vunpack.c.l.bf16 %v405
        %v438 = vunpack.c.l.bf16 %v406
        %v439 = vunpack.c.l.bf16 %v407
        %v440 = vunpack.c.l.bf16 %v408
        %v441 = vunpack.c.l.bf16 %v409
        %v442 = vunpack.c.l.bf16 %v410
        %v443 = vunpack.c.l.bf16 %v411
        %v444 = vunpack.c.l.bf16 %v412
        %v445 = vunpack.c.l.bf16 %v413
        %v446 = vunpack.c.l.bf16 %v414
        %v447 = vunpack.c.l.bf16 %v415
        %v448 = vunpack.c.l.bf16 %v416
        %v449 = vunpack.c.l.bf16 %v417
        %v450 = vunpack.c.l.bf16 %v418
        %v451 = vunpack.c.l.bf16 %v419
        %v452 = vunpack.c.l.bf16 %v420
        %v453 = vunpack.c.l.bf16 %v421
        %v454 = vunpack.c.l.bf16 %v422
        %v455 = vunpack.c.l.bf16 %v423
        %v456 = vunpack.c.l.bf16 %v424
        %v457 = vunpack.c.l.bf16 %v425
        %v458 = vunpack.c.l.bf16 %v426
        %v459 = vunpack.c.l.bf16 %v427
        %v460 = vunpack.c.l.bf16 %v428
        %v461 = vunpack.c.l.bf16 %v429
        %v462 = vunpack.c.l.bf16 %v430
        %v463 = vunpack.c.l.bf16 %v431
        %v464 = vunpack.c.l.bf16 %v432
        %v465 = vld [vmem:[%s343] sm:$0xf]
        %v466 = vld [vmem:[%s343 + $0x4] sm:$0xf]
        %v467 = vld [vmem:[%s343 + $0x8] sm:$0xf]
        %v468 = vld [vmem:[%s343 + $0xc] sm:$0xf]
        %v469 = vld [vmem:[%s343 + $0x10] sm:$0xf]
        %v470 = vld [vmem:[%s343 + $0x14] sm:$0xf]
        %v471 = vld [vmem:[%s343 + $0x18] sm:$0xf]
        %v472 = vld [vmem:[%s343 + $0x1c] sm:$0xf]
        %v473 = vld [vmem:[%s343 + $0x20] sm:$0xf]
        %v474 = vld [vmem:[%s343 + $0x24] sm:$0xf]
        %v475 = vld [vmem:[%s343 + $0x28] sm:$0xf]
        %v476 = vld [vmem:[%s343 + $0x2c] sm:$0xf]
        %v477 = vld [vmem:[%s343 + $0x30] sm:$0xf]
        %v478 = vld [vmem:[%s343 + $0x34] sm:$0xf]
        %v479 = vld [vmem:[%s343 + $0x38] sm:$0xf]
        %v480 = vld [vmem:[%s343 + $0x3c] sm:$0xf]
        %v481 = vld [vmem:[%s343 + $0x40] sm:$0xf]
        %v482 = vld [vmem:[%s343 + $0x44] sm:$0xf]
        %v483 = vld [vmem:[%s343 + $0x48] sm:$0xf]
        %v484 = vld [vmem:[%s343 + $0x4c] sm:$0xf]
        %v485 = vld [vmem:[%s343 + $0x50] sm:$0xf]
        %v486 = vld [vmem:[%s343 + $0x54] sm:$0xf]
        %v487 = vld [vmem:[%s343 + $0x58] sm:$0xf]
        %v488 = vld [vmem:[%s343 + $0x5c] sm:$0xf]
        %v489 = vld [vmem:[%s343 + $0x60] sm:$0xf]
        %v490 = vld [vmem:[%s343 + $0x64] sm:$0xf]
        %v491 = vld [vmem:[%s343 + $0x68] sm:$0xf]
        %v492 = vld [vmem:[%s343 + $0x6c] sm:$0xf]
        %v493 = vld [vmem:[%s343 + $0x70] sm:$0xf]
        %v494 = vld [vmem:[%s343 + $0x74] sm:$0xf]
        %v495 = vld [vmem:[%s343 + $0x78] sm:$0xf]
        %v496 = vld [vmem:[%s343 + $0x7c] sm:$0xf]
        %v497 = vunpack.c.l.bf16 %v465
        %v498 = vunpack.c.l.bf16 %v466
        %v499 = vunpack.c.l.bf16 %v467
        %v500 = vunpack.c.l.bf16 %v468
        %v501 = vunpack.c.l.bf16 %v469
        %v502 = vunpack.c.l.bf16 %v470
        %v503 = vunpack.c.l.bf16 %v471
        %v504 = vunpack.c.l.bf16 %v472
        %v505 = vunpack.c.l.bf16 %v473
        %v506 = vunpack.c.l.bf16 %v474
        %v507 = vunpack.c.l.bf16 %v475
        %v508 = vunpack.c.l.bf16 %v476
        %v509 = vunpack.c.l.bf16 %v477
        %v510 = vunpack.c.l.bf16 %v478
        %v511 = vunpack.c.l.bf16 %v479
        %v512 = vunpack.c.l.bf16 %v480
        %v513 = vunpack.c.l.bf16 %v481
        %v514 = vunpack.c.l.bf16 %v482
        %v515 = vunpack.c.l.bf16 %v483
        %v516 = vunpack.c.l.bf16 %v484
        %v517 = vunpack.c.l.bf16 %v485
        %v518 = vunpack.c.l.bf16 %v486
        %v519 = vunpack.c.l.bf16 %v487
        %v520 = vunpack.c.l.bf16 %v488
        %v521 = vunpack.c.l.bf16 %v489
        %v522 = vunpack.c.l.bf16 %v490
        %v523 = vunpack.c.l.bf16 %v491
        %v524 = vunpack.c.l.bf16 %v492
        %v525 = vunpack.c.l.bf16 %v493
        %v526 = vunpack.c.l.bf16 %v494
        %v527 = vunpack.c.l.bf16 %v495
        %v528 = vunpack.c.l.bf16 %v496
        %v529 = vld [vmem:[%s352] sm:$0xf]
        %v530 = vld [vmem:[%s352 + $0x4] sm:$0xf]
        %v531 = vld [vmem:[%s352 + $0x8] sm:$0xf]
        %v532 = vld [vmem:[%s352 + $0xc] sm:$0xf]
        %v533 = vld [vmem:[%s352 + $0x10] sm:$0xf]
        %v534 = vld [vmem:[%s352 + $0x14] sm:$0xf]
        %v535 = vld [vmem:[%s352 + $0x18] sm:$0xf]
        %v536 = vld [vmem:[%s352 + $0x1c] sm:$0xf]
        %v537 = vld [vmem:[%s352 + $0x20] sm:$0xf]
        %v538 = vld [vmem:[%s352 + $0x24] sm:$0xf]
        %v539 = vld [vmem:[%s352 + $0x28] sm:$0xf]
        %v540 = vld [vmem:[%s352 + $0x2c] sm:$0xf]
        %v541 = vld [vmem:[%s352 + $0x30] sm:$0xf]
        %v542 = vld [vmem:[%s352 + $0x34] sm:$0xf]
        %v543 = vld [vmem:[%s352 + $0x38] sm:$0xf]
        %v544 = vld [vmem:[%s352 + $0x3c] sm:$0xf]
        %v545 = vld [vmem:[%s352 + $0x40] sm:$0xf]
        %v546 = vld [vmem:[%s352 + $0x44] sm:$0xf]
        %v547 = vld [vmem:[%s352 + $0x48] sm:$0xf]
        %v548 = vld [vmem:[%s352 + $0x4c] sm:$0xf]
        %v549 = vld [vmem:[%s352 + $0x50] sm:$0xf]
        %v550 = vld [vmem:[%s352 + $0x54] sm:$0xf]
        %v551 = vld [vmem:[%s352 + $0x58] sm:$0xf]
        %v552 = vld [vmem:[%s352 + $0x5c] sm:$0xf]
        %v553 = vld [vmem:[%s352 + $0x60] sm:$0xf]
        %v554 = vld [vmem:[%s352 + $0x64] sm:$0xf]
        %v555 = vld [vmem:[%s352 + $0x68] sm:$0xf]
        %v556 = vld [vmem:[%s352 + $0x6c] sm:$0xf]
        %v557 = vld [vmem:[%s352 + $0x70] sm:$0xf]
        %v558 = vld [vmem:[%s352 + $0x74] sm:$0xf]
        %v559 = vld [vmem:[%s352 + $0x78] sm:$0xf]
        %v560 = vld [vmem:[%s352 + $0x7c] sm:$0xf]
        %v561 = vunpack.c.l.bf16 %v529
        %v562 = vunpack.c.l.bf16 %v530
        %v563 = vunpack.c.l.bf16 %v531
        %v564 = vunpack.c.l.bf16 %v532
        %v565 = vunpack.c.l.bf16 %v533
        %v566 = vunpack.c.l.bf16 %v534
        %v567 = vunpack.c.l.bf16 %v535
        %v568 = vunpack.c.l.bf16 %v536
        %v569 = vunpack.c.l.bf16 %v537
        %v570 = vunpack.c.l.bf16 %v538
        %v571 = vunpack.c.l.bf16 %v539
        %v572 = vunpack.c.l.bf16 %v540
        %v573 = vunpack.c.l.bf16 %v541
        %v574 = vunpack.c.l.bf16 %v542
        %v575 = vunpack.c.l.bf16 %v543
        %v576 = vunpack.c.l.bf16 %v544
        %v577 = vunpack.c.l.bf16 %v545
        %v578 = vunpack.c.l.bf16 %v546
        %v579 = vunpack.c.l.bf16 %v547
        %v580 = vunpack.c.l.bf16 %v548
        %v581 = vunpack.c.l.bf16 %v549
        %v582 = vunpack.c.l.bf16 %v550
        %v583 = vunpack.c.l.bf16 %v551
        %v584 = vunpack.c.l.bf16 %v552
        %v585 = vunpack.c.l.bf16 %v553
        %v586 = vunpack.c.l.bf16 %v554
        %v587 = vunpack.c.l.bf16 %v555
        %v588 = vunpack.c.l.bf16 %v556
        %v589 = vunpack.c.l.bf16 %v557
        %v590 = vunpack.c.l.bf16 %v558
        %v591 = vunpack.c.l.bf16 %v559
        %v592 = vunpack.c.l.bf16 %v560
        %v593 = vld [vmem:[%s4] sm:$0x1]
        %v595 = vlaneseq
        %v596 = vshrl.u32 %v595, 7
        %v597 = vsub.s32 0, %v596
        %v598 = vrot.slane %v593, %v597
        %v600 = vmul.f32 %v598, %v497
        %v601 = vmul.f32 %v598, %v498
        %v602 = vmul.f32 %v598, %v499
        %v603 = vmul.f32 %v598, %v500
        %v604 = vmul.f32 %v598, %v501
        %v605 = vmul.f32 %v598, %v502
        %v606 = vmul.f32 %v598, %v503
        %v607 = vmul.f32 %v598, %v504
        %v608 = vmul.f32 %v598, %v505
        %v609 = vmul.f32 %v598, %v506
        %v610 = vmul.f32 %v598, %v507
        %v611 = vmul.f32 %v598, %v508
        %v612 = vmul.f32 %v598, %v509
        %v613 = vmul.f32 %v598, %v510
        %v614 = vmul.f32 %v598, %v511
        %v615 = vmul.f32 %v598, %v512
        %v616 = vmul.f32 %v598, %v513
        %v617 = vmul.f32 %v598, %v514
        %v618 = vmul.f32 %v598, %v515
        %v619 = vmul.f32 %v598, %v516
        %v620 = vmul.f32 %v598, %v517
        %v621 = vmul.f32 %v598, %v518
        %v622 = vmul.f32 %v598, %v519
        %v623 = vmul.f32 %v598, %v520
        %v624 = vmul.f32 %v598, %v521
        %v625 = vmul.f32 %v598, %v522
        %v626 = vmul.f32 %v598, %v523
        %v627 = vmul.f32 %v598, %v524
        %v628 = vmul.f32 %v598, %v525
        %v629 = vmul.f32 %v598, %v526
        %v630 = vmul.f32 %v598, %v527
        %v631 = vmul.f32 %v598, %v528
        %v632 = vld [vmem:[%s3] sm:$0x1]
        %v634 = vlaneseq
        %v635 = vshrl.u32 %v634, 7
        %v636 = vsub.s32 0, %v635
        %v637 = vrot.slane %v632, %v636
        %v639 = vmul.f32 %v637, %v433
        %v640 = vmul.f32 %v637, %v434
        %v641 = vmul.f32 %v637, %v435
        %v642 = vmul.f32 %v637, %v436
        %v643 = vmul.f32 %v637, %v437
        %v644 = vmul.f32 %v637, %v438
        %v645 = vmul.f32 %v637, %v439
        %v646 = vmul.f32 %v637, %v440
        %v647 = vmul.f32 %v637, %v441
        %v648 = vmul.f32 %v637, %v442
        %v649 = vmul.f32 %v637, %v443
        %v650 = vmul.f32 %v637, %v444
        %v651 = vmul.f32 %v637, %v445
        %v652 = vmul.f32 %v637, %v446
        %v653 = vmul.f32 %v637, %v447
        %v654 = vmul.f32 %v637, %v448
        %v655 = vmul.f32 %v637, %v449
        %v656 = vmul.f32 %v637, %v450
        %v657 = vmul.f32 %v637, %v451
        %v658 = vmul.f32 %v637, %v452
        %v659 = vmul.f32 %v637, %v453
        %v660 = vmul.f32 %v637, %v454
        %v661 = vmul.f32 %v637, %v455
        %v662 = vmul.f32 %v637, %v456
        %v663 = vmul.f32 %v637, %v457
        %v664 = vmul.f32 %v637, %v458
        %v665 = vmul.f32 %v637, %v459
        %v666 = vmul.f32 %v637, %v460
        %v667 = vmul.f32 %v637, %v461
        %v668 = vmul.f32 %v637, %v462
        %v669 = vmul.f32 %v637, %v463
        %v670 = vmul.f32 %v637, %v464
        %v671 = vstv %s398
        %v672 = vmul.f32 %v671, %v639
        %v673 = vmul.f32 %v671, %v640
        %v674 = vmul.f32 %v671, %v641
        %v675 = vmul.f32 %v671, %v642
        %v676 = vmul.f32 %v671, %v643
        %v677 = vmul.f32 %v671, %v644
        %v678 = vmul.f32 %v671, %v645
        %v679 = vmul.f32 %v671, %v646
        %v680 = vmul.f32 %v671, %v647
        %v681 = vmul.f32 %v671, %v648
        %v682 = vmul.f32 %v671, %v649
        %v683 = vmul.f32 %v671, %v650
        %v684 = vmul.f32 %v671, %v651
        %v685 = vmul.f32 %v671, %v652
        %v686 = vmul.f32 %v671, %v653
        %v687 = vmul.f32 %v671, %v654
        %v688 = vmul.f32 %v671, %v655
        %v689 = vmul.f32 %v671, %v656
        %v690 = vmul.f32 %v671, %v657
        %v691 = vmul.f32 %v671, %v658
        %v692 = vmul.f32 %v671, %v659
        %v693 = vmul.f32 %v671, %v660
        %v694 = vmul.f32 %v671, %v661
        %v695 = vmul.f32 %v671, %v662
        %v696 = vmul.f32 %v671, %v663
        %v697 = vmul.f32 %v671, %v664
        %v698 = vmul.f32 %v671, %v665
        %v699 = vmul.f32 %v671, %v666
        %v700 = vmul.f32 %v671, %v667
        %v701 = vmul.f32 %v671, %v668
        %v702 = vmul.f32 %v671, %v669
        %v703 = vmul.f32 %v671, %v670
        %v704 = vadd.f32 %v600, %v672
        %v705 = vadd.f32 %v601, %v673
        %v706 = vadd.f32 %v602, %v674
        %v707 = vadd.f32 %v603, %v675
        %v708 = vadd.f32 %v604, %v676
        %v709 = vadd.f32 %v605, %v677
        %v710 = vadd.f32 %v606, %v678
        %v711 = vadd.f32 %v607, %v679
        %v712 = vadd.f32 %v608, %v680
        %v713 = vadd.f32 %v609, %v681
        %v714 = vadd.f32 %v610, %v682
        %v715 = vadd.f32 %v611, %v683
        %v716 = vadd.f32 %v612, %v684
        %v717 = vadd.f32 %v613, %v685
        %v718 = vadd.f32 %v614, %v686
        %v719 = vadd.f32 %v615, %v687
        %v720 = vadd.f32 %v616, %v688
        %v721 = vadd.f32 %v617, %v689
        %v722 = vadd.f32 %v618, %v690
        %v723 = vadd.f32 %v619, %v691
        %v724 = vadd.f32 %v620, %v692
        %v725 = vadd.f32 %v621, %v693
        %v726 = vadd.f32 %v622, %v694
        %v727 = vadd.f32 %v623, %v695
        %v728 = vadd.f32 %v624, %v696
        %v729 = vadd.f32 %v625, %v697
        %v730 = vadd.f32 %v626, %v698
        %v731 = vadd.f32 %v627, %v699
        %v732 = vadd.f32 %v628, %v700
        %v733 = vadd.f32 %v629, %v701
        %v734 = vadd.f32 %v630, %v702
        %v735 = vadd.f32 %v631, %v703
        %v736 = vld [vmem:[%s5] sm:$0x1]
        %v738 = vlaneseq
        %v739 = vshrl.u32 %v738, 7
        %v740 = vsub.s32 0, %v739
        %v741 = vrot.slane %v736, %v740
        %v743 = vmul.f32 %v741, %v561
        %v744 = vmul.f32 %v741, %v562
        %v745 = vmul.f32 %v741, %v563
        %v746 = vmul.f32 %v741, %v564
        %v747 = vmul.f32 %v741, %v565
        %v748 = vmul.f32 %v741, %v566
        %v749 = vmul.f32 %v741, %v567
        %v750 = vmul.f32 %v741, %v568
        %v751 = vmul.f32 %v741, %v569
        %v752 = vmul.f32 %v741, %v570
        %v753 = vmul.f32 %v741, %v571
        %v754 = vmul.f32 %v741, %v572
        %v755 = vmul.f32 %v741, %v573
        %v756 = vmul.f32 %v741, %v574
        %v757 = vmul.f32 %v741, %v575
        %v758 = vmul.f32 %v741, %v576
        %v759 = vmul.f32 %v741, %v577
        %v760 = vmul.f32 %v741, %v578
        %v761 = vmul.f32 %v741, %v579
        %v762 = vmul.f32 %v741, %v580
        %v763 = vmul.f32 %v741, %v581
        %v764 = vmul.f32 %v741, %v582
        %v765 = vmul.f32 %v741, %v583
        %v766 = vmul.f32 %v741, %v584
        %v767 = vmul.f32 %v741, %v585
        %v768 = vmul.f32 %v741, %v586
        %v769 = vmul.f32 %v741, %v587
        %v770 = vmul.f32 %v741, %v588
        %v771 = vmul.f32 %v741, %v589
        %v772 = vmul.f32 %v741, %v590
        %v773 = vmul.f32 %v741, %v591
        %v774 = vmul.f32 %v741, %v592
        %v775 = vstv %s400
        %v776 = vmul.f32 %v775, %v743
        %v777 = vmul.f32 %v775, %v744
        %v778 = vmul.f32 %v775, %v745
        %v779 = vmul.f32 %v775, %v746
        %v780 = vmul.f32 %v775, %v747
        %v781 = vmul.f32 %v775, %v748
        %v782 = vmul.f32 %v775, %v749
        %v783 = vmul.f32 %v775, %v750
        %v784 = vmul.f32 %v775, %v751
        %v785 = vmul.f32 %v775, %v752
        %v786 = vmul.f32 %v775, %v753
        %v787 = vmul.f32 %v775, %v754
        %v788 = vmul.f32 %v775, %v755
        %v789 = vmul.f32 %v775, %v756
        %v790 = vmul.f32 %v775, %v757
        %v791 = vmul.f32 %v775, %v758
        %v792 = vmul.f32 %v775, %v759
        %v793 = vmul.f32 %v775, %v760
        %v794 = vmul.f32 %v775, %v761
        %v795 = vmul.f32 %v775, %v762
        %v796 = vmul.f32 %v775, %v763
        %v797 = vmul.f32 %v775, %v764
        %v798 = vmul.f32 %v775, %v765
        %v799 = vmul.f32 %v775, %v766
        %v800 = vmul.f32 %v775, %v767
        %v801 = vmul.f32 %v775, %v768
        %v802 = vmul.f32 %v775, %v769
        %v803 = vmul.f32 %v775, %v770
        %v804 = vmul.f32 %v775, %v771
        %v805 = vmul.f32 %v775, %v772
        %v806 = vmul.f32 %v775, %v773
        %v807 = vmul.f32 %v775, %v774
        %v808 = vadd.f32 %v704, %v776
        %v809 = vadd.f32 %v705, %v777
        %v810 = vadd.f32 %v706, %v778
        %v811 = vadd.f32 %v707, %v779
        %v812 = vadd.f32 %v708, %v780
        %v813 = vadd.f32 %v709, %v781
        %v814 = vadd.f32 %v710, %v782
        %v815 = vadd.f32 %v711, %v783
        %v816 = vadd.f32 %v712, %v784
        %v817 = vadd.f32 %v713, %v785
        %v818 = vadd.f32 %v714, %v786
        %v819 = vadd.f32 %v715, %v787
        %v820 = vadd.f32 %v716, %v788
        %v821 = vadd.f32 %v717, %v789
        %v822 = vadd.f32 %v718, %v790
        %v823 = vadd.f32 %v719, %v791
        %v824 = vadd.f32 %v720, %v792
        %v825 = vadd.f32 %v721, %v793
        %v826 = vadd.f32 %v722, %v794
        %v827 = vadd.f32 %v723, %v795
        %v828 = vadd.f32 %v724, %v796
        %v829 = vadd.f32 %v725, %v797
        %v830 = vadd.f32 %v726, %v798
        %v831 = vadd.f32 %v727, %v799
        %v832 = vadd.f32 %v728, %v800
        %v833 = vadd.f32 %v729, %v801
        %v834 = vadd.f32 %v730, %v802
        %v835 = vadd.f32 %v731, %v803
        %v836 = vadd.f32 %v732, %v804
        %v837 = vadd.f32 %v733, %v805
        %v838 = vadd.f32 %v734, %v806
        %v839 = vadd.f32 %v735, %v807
        %v840 = vmax.f32 %v808, 0.0
        %v841 = vmax.f32 %v809, 0.0
        %v842 = vmax.f32 %v810, 0.0
        %v843 = vmax.f32 %v811, 0.0
        %v844 = vmax.f32 %v812, 0.0
        %v845 = vmax.f32 %v813, 0.0
        %v846 = vmax.f32 %v814, 0.0
        %v847 = vmax.f32 %v815, 0.0
        %v848 = vmax.f32 %v816, 0.0
        %v849 = vmax.f32 %v817, 0.0
        %v850 = vmax.f32 %v818, 0.0
        %v851 = vmax.f32 %v819, 0.0
        %v852 = vmax.f32 %v820, 0.0
        %v853 = vmax.f32 %v821, 0.0
        %v854 = vmax.f32 %v822, 0.0
        %v855 = vmax.f32 %v823, 0.0
        %v856 = vmax.f32 %v824, 0.0
        %v857 = vmax.f32 %v825, 0.0
        %v858 = vmax.f32 %v826, 0.0
        %v859 = vmax.f32 %v827, 0.0
        %v860 = vmax.f32 %v828, 0.0
        %v861 = vmax.f32 %v829, 0.0
        %v862 = vmax.f32 %v830, 0.0
        %v863 = vmax.f32 %v831, 0.0
        %v864 = vmax.f32 %v832, 0.0
        %v865 = vmax.f32 %v833, 0.0
        %v866 = vmax.f32 %v834, 0.0
        %v867 = vmax.f32 %v835, 0.0
        %v868 = vmax.f32 %v836, 0.0
        %v869 = vmax.f32 %v837, 0.0
        %v870 = vmax.f32 %v838, 0.0
        %v871 = vmax.f32 %v839, 0.0
        %v872 = vpack.c.bf16 %v841, %v840
        %v873 = vpack.c.bf16 %v843, %v842
        %v874 = vpack.c.bf16 %v845, %v844
        %v875 = vpack.c.bf16 %v847, %v846
        %v876 = vpack.c.bf16 %v849, %v848
        %v877 = vpack.c.bf16 %v851, %v850
        %v878 = vpack.c.bf16 %v853, %v852
        %v879 = vpack.c.bf16 %v855, %v854
        %v880 = vpack.c.bf16 %v857, %v856
        %v881 = vpack.c.bf16 %v859, %v858
        %v882 = vpack.c.bf16 %v861, %v860
        %v883 = vpack.c.bf16 %v863, %v862
        %v884 = vpack.c.bf16 %v865, %v864
        %v885 = vpack.c.bf16 %v867, %v866
        %v886 = vpack.c.bf16 %v869, %v868
        %v887 = vpack.c.bf16 %v871, %v870
        %v904 = vunpack.c.l.b16 %v872
        %v905 = vunpack.c.h.b16 %v872
        %v906 = vunpack.c.l.b16 %v873
        %v907 = vunpack.c.h.b16 %v873
        %v908 = vunpack.c.l.b16 %v874
        %v909 = vunpack.c.h.b16 %v874
        %v910 = vunpack.c.l.b16 %v875
        %v911 = vunpack.c.h.b16 %v875
        %v912 = vunpack.c.l.b16 %v876
        %v913 = vunpack.c.h.b16 %v876
        %v914 = vunpack.c.l.b16 %v877
        %v915 = vunpack.c.h.b16 %v877
        %v916 = vunpack.c.l.b16 %v878
        %v917 = vunpack.c.h.b16 %v878
        %v918 = vunpack.c.l.b16 %v879
        %v919 = vunpack.c.h.b16 %v879
        %v920 = vunpack.c.l.b16 %v880
        %v921 = vunpack.c.h.b16 %v880
        %v922 = vunpack.c.l.b16 %v881
        %v923 = vunpack.c.h.b16 %v881
        %v924 = vunpack.c.l.b16 %v882
        %v925 = vunpack.c.h.b16 %v882
        %v926 = vunpack.c.l.b16 %v883
        %v927 = vunpack.c.h.b16 %v883
        %v928 = vunpack.c.l.b16 %v884
        %v929 = vunpack.c.h.b16 %v884
        %v930 = vunpack.c.l.b16 %v885
        %v931 = vunpack.c.h.b16 %v885
        %v932 = vunpack.c.l.b16 %v886
        %v933 = vunpack.c.h.b16 %v886
        %v934 = vunpack.c.l.b16 %v887
        %v935 = vunpack.c.h.b16 %v887
        %v936 = vpack.c.b16 %v904, %v904
        %v937 = vpack.c.b16 %v905, %v905
        %v938 = vpack.c.b16 %v906, %v906
        %v939 = vpack.c.b16 %v907, %v907
        %v940 = vpack.c.b16 %v908, %v908
        %v941 = vpack.c.b16 %v909, %v909
        %v942 = vpack.c.b16 %v910, %v910
        %v943 = vpack.c.b16 %v911, %v911
        %v944 = vpack.c.b16 %v912, %v912
        %v945 = vpack.c.b16 %v913, %v913
        %v946 = vpack.c.b16 %v914, %v914
        %v947 = vpack.c.b16 %v915, %v915
        %v948 = vpack.c.b16 %v916, %v916
        %v949 = vpack.c.b16 %v917, %v917
        %v950 = vpack.c.b16 %v918, %v918
        %v951 = vpack.c.b16 %v919, %v919
        %v952 = vpack.c.b16 %v920, %v920
        %v953 = vpack.c.b16 %v921, %v921
        %v954 = vpack.c.b16 %v922, %v922
        %v955 = vpack.c.b16 %v923, %v923
        %v956 = vpack.c.b16 %v924, %v924
        %v957 = vpack.c.b16 %v925, %v925
        %v958 = vpack.c.b16 %v926, %v926
        %v959 = vpack.c.b16 %v927, %v927
        %v960 = vpack.c.b16 %v928, %v928
        %v961 = vpack.c.b16 %v929, %v929
        %v962 = vpack.c.b16 %v930, %v930
        %v963 = vpack.c.b16 %v931, %v931
        %v964 = vpack.c.b16 %v932, %v932
        %v965 = vpack.c.b16 %v933, %v933
        %v966 = vpack.c.b16 %v934, %v934
        %v967 = vpack.c.b16 %v935, %v935
        %1000 = vst [vmem:[%s390] sm:$0xf] %v936
        %1001 = vst [vmem:[%s390 + $0x4] sm:$0xf] %v937
        %1002 = vst [vmem:[%s390 + $0x8] sm:$0xf] %v938
        %1003 = vst [vmem:[%s390 + $0xc] sm:$0xf] %v939
        %1004 = vst [vmem:[%s390 + $0x10] sm:$0xf] %v940
        %1005 = vst [vmem:[%s390 + $0x14] sm:$0xf] %v941
        %1006 = vst [vmem:[%s390 + $0x18] sm:$0xf] %v942
        %1007 = vst [vmem:[%s390 + $0x1c] sm:$0xf] %v943
        %1008 = vst [vmem:[%s390 + $0x20] sm:$0xf] %v944
        %1009 = vst [vmem:[%s390 + $0x24] sm:$0xf] %v945
        %1010 = vst [vmem:[%s390 + $0x28] sm:$0xf] %v946
        %1011 = vst [vmem:[%s390 + $0x2c] sm:$0xf] %v947
        %1012 = vst [vmem:[%s390 + $0x30] sm:$0xf] %v948
        %1013 = vst [vmem:[%s390 + $0x34] sm:$0xf] %v949
        %1014 = vst [vmem:[%s390 + $0x38] sm:$0xf] %v950
        %1015 = vst [vmem:[%s390 + $0x3c] sm:$0xf] %v951
        %1016 = vst [vmem:[%s390 + $0x40] sm:$0xf] %v952
        %1017 = vst [vmem:[%s390 + $0x44] sm:$0xf] %v953
        %1018 = vst [vmem:[%s390 + $0x48] sm:$0xf] %v954
        %1019 = vst [vmem:[%s390 + $0x4c] sm:$0xf] %v955
        %1020 = vst [vmem:[%s390 + $0x50] sm:$0xf] %v956
        %1021 = vst [vmem:[%s390 + $0x54] sm:$0xf] %v957
        %1022 = vst [vmem:[%s390 + $0x58] sm:$0xf] %v958
        %1023 = vst [vmem:[%s390 + $0x5c] sm:$0xf] %v959
        %1024 = vst [vmem:[%s390 + $0x60] sm:$0xf] %v960
        %1025 = vst [vmem:[%s390 + $0x64] sm:$0xf] %v961
        %1026 = vst [vmem:[%s390 + $0x68] sm:$0xf] %v962
        %1027 = vst [vmem:[%s390 + $0x6c] sm:$0xf] %v963
        %1028 = vst [vmem:[%s390 + $0x70] sm:$0xf] %v964
        %1029 = vst [vmem:[%s390 + $0x74] sm:$0xf] %v965
        %1030 = vst [vmem:[%s390 + $0x78] sm:$0xf] %v966
        %1031 = vst [vmem:[%s390 + $0x7c] sm:$0xf] %v967
        %s1032 = sand.u32 %s207, 1
        %s1033 = scalar_lea.sflag [#allocation4], %s1032
        %s1034 = sand.u32 %s207, 1
        %s1035 = smul.addr %s1034, 128
        %s1036 = scalar_lea.vmem [#allocation8], %s1035
        // Predicated region
        $region57: #{tpu_custom_call.1} parent=43 // pred_check
          %p1037 = pneg %p217
        $region58: #{tpu_custom_call.1} parent=43 // pred_check_branch
          %1039 = sbr.rel (%p1037) target = $region60
        $region59: #{tpu_custom_call.1} parent=43 // pred_region
          %s1041 = ssub.s32 2048, 2048
          %1042 = vsyncadd %s1033, %s1041
          %s1043 = smul.addr %s31, 32
          %s1044 = smul.addr %s30, 256
          %s1045 = sadd.s32 %s1043, %s1044
          %s1046 = smul.addr %s1045, 64
          %s1047 = scalar_lea.hbm %s6, %s1046
          %s1048 = sshll.u32 %s1036, 4
          %s1049 = int_to_ptr.vmem [resolvable:$true] %s1048
          %1054 = dma.vmem_to_hbm [thread:$0]  %s1049, 2048, %s1047, %s1033, 64, 64, 4
        $region60: #{tpu_custom_call.1} parent=43 // pred_fallthru
          _
      $region44: #{tpu_custom_call.1} parent=5 // pred_fallthru
        _
      %p1055 = scmp.le.s32.totalorder 2, %s21
      // Predicated region
      $region61: #{tpu_custom_call.1} parent=5 // pred_check
        %p1056 = pneg %p1055
      $region62: #{tpu_custom_call.1} parent=5 // pred_check_branch
        %1058 = sbr.rel (%p1056) target = $region64
      $region63: #{tpu_custom_call.1} parent=5 // pred_region
        %s1059 = ssub.s32 %s21, 2
        // Predicated region
        $region65: #{tpu_custom_call.1} parent=63 // pred_check
          %p1060 = pneg %p223
        $region66: #{tpu_custom_call.1} parent=63 // pred_check_branch
          %1062 = sbr.rel (%p1060) target = $region68
        $region67: #{tpu_custom_call.1} parent=63 // pred_region
          %s1063 = sand.u32 %s208, 1
          %s1064 = scalar_lea.sflag [#allocation4], %s1063
          %s1065 = sand.u32 %s208, 1
          %s1066 = smul.addr %s1065, 128
          %s1067 = scalar_lea.vmem [#allocation8], %s1066
          %1068 = dma.done %s1064, 2048
        $region68: #{tpu_custom_call.1} parent=63 // pred_fallthru
          _
      $region64: #{tpu_custom_call.1} parent=5 // pred_fallthru
        _
    $region6: #{tpu_custom_call.1} parent=1 // loop_footer
      %s25 = sadd.s32 1, %s21
    $region7: #{tpu_custom_call.1} parent=1 // loop_footer_branch
      %20 = sbr.rel target = $region3
    $region8: #{tpu_custom_call.1} parent=1 // loop_exit
      _
    %1069 = vsyncpa [#allocation3], 1
    %s1070 = scalar_lea.sflag [#allocation3], 1
    %1071 = vsyncpa %s1070, 1
    %1072 = vsyncpa [#allocation6], 1
    %s1073 = scalar_lea.sflag [#allocation6], 1
    %1074 = vsyncpa %s1073, 1
    %1075 = vsyncpa [#allocation4], 1
    %s1076 = scalar_lea.sflag [#allocation4], 1
    %1077 = vsyncpa %s1076, 1

</llo_original>
